<compile_context>
chip_gen: v5e
topology: v5e:2x2
jax: 0.10.0
libtpu: 0.0.40
codegen_flags: <defaults>
</compile_context>

<pallas_src>
import functools

import jax
import jax.numpy as jnp
from jax.experimental import pallas as pl
from jax.experimental.pallas import tpu as pltpu


def _round_up(x, m):
    return (x + m - 1) // m * m


def cbc_kernel(x_ref, c_ref, wf_ref, w1h_ref, w2h_ref, bias_ref, out_ref,
               *, h1p, h2p):
    # Concatenate the x and c tiles in VMEM (small copy, ld/st slots have
    # slack), cast once to bf16 for the MXU.  All matmuls accumulate in f32
    # and the epilogue (bias add / ReLU) runs on the f32 accumulators.
    xc = jnp.concatenate([x_ref[...], c_ref[...]], axis=-1).astype(jnp.bfloat16)

    # One fused matmul: [x, c] @ [W0x|0|0 ; W0c|W1c|W2c]  (+ all three biases).
    #   lanes [0:h1p]        = layer-0 pre-activation (x@W0x + c@W0c + b0)
    #   lanes [h1p:h1p+h2p]  = layer-1 conditioning term (c@W1c + b1)
    #   lanes [h1p+h2p:]     = output-layer conditioning term (c@W2c + b2)
    fused = jnp.dot(xc, wf_ref[...], preferred_element_type=jnp.float32)
    fused = fused + bias_ref[...]

    # layer 0: ReLU of the first h1p lanes (already complete).
    h = jnp.maximum(fused[:, :h1p], 0.0)

    # layer 1: ReLU(h @ W1h + (c @ W1c + b1))
    h2 = jnp.dot(h.astype(jnp.bfloat16), w1h_ref[...],
                 preferred_element_type=jnp.float32)
    h2 = jnp.maximum(h2 + fused[:, h1p:h1p + h2p], 0.0)

    # output layer: h2 @ W2h + (c @ W2c + b2)   (no ReLU)
    o = jnp.dot(h2.astype(jnp.bfloat16), w2h_ref[...],
                preferred_element_type=jnp.float32)
    o = o + fused[:, h1p + h2p:]
    out_ref[...] = o.astype(out_ref.dtype)


def prepare_params(params, dim_input, dim_conditioning):
    """One-time weight prep (call at init, NOT per forward):
    - split each Linear weight into its previous-activation block and its
      conditioning block (folds the torch.cat into split matmuls),
    - pad hidden / output widths up to 128 lanes (zero columns stay zero
      through bias+ReLU),
    - fold W0x and all three conditioning blocks into ONE fused RHS matrix,
      and pack all three biases into one (1, nw) f32 row,
    - cast all matmul weights to bf16 (biases stay f32)."""
    W0, b0 = params["W0"], params["b0"]
    W1, b1 = params["W1"], params["b1"]
    W2, b2 = params["W2"], params["b2"]
    h1, h2, d_out = W0.shape[1], W1.shape[1], W2.shape[1]
    h1p, h2p = _round_up(h1, 128), _round_up(h2, 128)
    doutp = _round_up(d_out, 128)
    dxc = dim_input + dim_conditioning

    def pad_cols(w, n):
        return jnp.pad(w, ((0, 0), (0, n - w.shape[1])))

    def pad_rows(w, n):
        return jnp.pad(w, ((0, n - w.shape[0]), (0, 0)))

    w0x = pad_cols(W0[:dim_input], h1p)                    # (dim_in, h1p)
    w0c = pad_cols(W0[dim_input:], h1p)                    # (dim_c,  h1p)
    w1h = pad_cols(pad_rows(W1[:h1], h1p), h2p)            # (h1p,    h2p)
    w1c = pad_cols(W1[h1:], h2p)                           # (dim_c,  h2p)
    w2h = pad_cols(pad_rows(W2[:h2], h2p), doutp)          # (h2p,    doutp)
    w2c = pad_cols(W2[h2:], doutp)                         # (dim_c,  doutp)

    # Fused RHS (dim_in + dim_c, h1p + h2p + doutp):
    #   [ W0x   0     0   ]
    #   [ W0c  W1c   W2c  ]
    zeros_x1 = jnp.zeros((dim_input, h2p), W0.dtype)
    zeros_x2 = jnp.zeros((dim_input, doutp), W0.dtype)
    wf = jnp.concatenate([
        jnp.concatenate([w0x, zeros_x1, zeros_x2], axis=1),
        jnp.concatenate([w0c, w1c, w2c], axis=1)], axis=0)
    assert wf.shape == (dxc, h1p + h2p + doutp)

    bias = jnp.concatenate([
        pad_cols(b0.reshape(1, -1), h1p),
        pad_cols(b1.reshape(1, -1), h2p),
        pad_cols(b2.reshape(1, -1), doutp)], axis=1).astype(jnp.float32)

    return {
        "wf": wf.astype(jnp.bfloat16),
        "w1h": w1h.astype(jnp.bfloat16),
        "w2h": w2h.astype(jnp.bfloat16),
        "bias": bias,
        "h1p": h1p, "h2p": h2p, "doutp": doutp,
        "dim_in": dim_input, "dim_c": dim_conditioning, "d_out": d_out,
    }


def _choose_tb(B, max_tb=1024):
    """Single tile for small/medium batches; 1024-row tiles beyond that."""
    if B <= max_tb:
        return max(_round_up(B, 16), 16)
    return max_tb


def cbc_forward(states, conditioning, prep, *, tb=None):
    """Forward pass. `prep` comes from prepare_params()."""
    B = states.shape[0]
    dim_in, dim_c = prep["dim_in"], prep["dim_c"]
    h1p, h2p, doutp, d_out = prep["h1p"], prep["h2p"], prep["doutp"], prep["d_out"]

    if tb is None:
        tb = _choose_tb(B)

    # Pad batch to a multiple of the batch tile (no-op when B <= 1024 and
    # already a multiple of 16, e.g. the common power-of-two batches).
    bp = _round_up(max(B, tb), tb)
    if bp != B:
        states = jnp.pad(states, ((0, bp - B), (0, 0)))
        conditioning = jnp.pad(conditioning, ((0, bp - B), (0, 0)))

    dxc = dim_in + dim_c
    nw = h1p + h2p + doutp

    kernel = functools.partial(cbc_kernel, h1p=h1p, h2p=h2p)

    flops = 2 * bp * (dxc * nw + h1p * h2p + h2p * doutp)
    bytes_accessed = (bp * dim_in * 4 + bp * dim_c * 4 + bp * doutp * 2
                      + 2 * (dxc * nw + h1p * h2p + h2p * doutp) + 4 * nw)

    out_padded = pl.pallas_call(
        kernel,
        out_shape=jax.ShapeDtypeStruct((bp, doutp), jnp.bfloat16),
        grid_spec=pltpu.PrefetchScalarGridSpec(
            num_scalar_prefetch=0,
            grid=(pl.cdiv(bp, tb),),
            in_specs=[
                # batch-tiled activations
                pl.BlockSpec((tb, dim_in), lambda i: (i, 0)),
                pl.BlockSpec((tb, dim_c), lambda i: (i, 0)),
                # weights / bias: constant block index -> VMEM-resident
                pl.BlockSpec((dxc, nw), lambda i: (0, 0)),
                pl.BlockSpec((h1p, h2p), lambda i: (0, 0)),
                pl.BlockSpec((h2p, doutp), lambda i: (0, 0)),
                pl.BlockSpec((1, nw), lambda i: (0, 0)),
            ],
            out_specs=pl.BlockSpec((tb, doutp), lambda i: (i, 0)),
        ),
        compiler_params=pltpu.CompilerParams(
            dimension_semantics=("parallel",)),
        cost_estimate=pl.CostEstimate(
            flops=flops, transcendentals=0, bytes_accessed=bytes_accessed),
    )(states, conditioning, prep["wf"], prep["w1h"], prep["w2h"], prep["bias"])

    # Slice off batch padding and lane padding; return f32 for consumers.
    return out_padded[:B, :d_out].astype(jnp.float32)


def reference_forward(states, conditioning, params):
    """Pure-JAX (f32) reference matching the PyTorch forward literally."""
    out = jnp.concatenate([states, conditioning], axis=1)
    out = jnp.maximum(out @ params["W0"] + params["b0"], 0.0)
    out = jnp.concatenate([out, conditioning], axis=1)
    out = jnp.maximum(out @ params["W1"] + params["b1"], 0.0)
    out = jnp.concatenate([out, conditioning], axis=1)
    out = out @ params["W2"] + params["b2"]
    return out


def init_params(key, dim_input, dim_conditioning, dim_output, layers):
    """Deterministic init (uniform, PyTorch-Linear-style bounds)."""
    params = {}
    dims_in = [dim_input + dim_conditioning,
               layers[0] + dim_conditioning,
               layers[1] + dim_conditioning]
    dims_out = [layers[0], layers[1], dim_output]
    for i, (di, do) in enumerate(zip(dims_in, dims_out)):
        key, kw, kb = jax.random.split(key, 3)
        bound = 1.0 / jnp.sqrt(di)
        params[f"W{i}"] = jax.random.uniform(
            kw, (di, do), jnp.float32, minval=-bound, maxval=bound)
        params[f"b{i}"] = jax.random.uniform(
            kb, (do,), jnp.float32, minval=-bound, maxval=bound)
    return params


if __name__ == "__main__":
    # Small shapes consistent with the module: dim_input=32, dim_conditioning=16,
    # hidden layers=[64, 64], dim_output=8.  Batch 256 runs as ONE 256-row tile
    # (grid=(1,)): no batch padding and no wrapper-side concat/pad ops.
    B, DIM_IN, DIM_C, DIM_OUT = 256, 32, 16, 8
    LAYERS = [64, 64]

    key = jax.random.PRNGKey(0)
    k_x, k_c, k_p = jax.random.split(key, 3)
    states = jax.random.normal(k_x, (B, DIM_IN), jnp.float32)
    conditioning = jax.random.normal(k_c, (B, DIM_C), jnp.float32)
    params = init_params(k_p, DIM_IN, DIM_C, DIM_OUT, LAYERS)

    # Weight split / fuse / pad / bf16 cast done ONCE here, not per forward call.
    prep = prepare_params(params, DIM_IN, DIM_C)

    out = cbc_forward(states, conditioning, prep)
    out = jax.block_until_ready(out)

    ref = reference_forward(states, conditioning, params)
    assert out.shape == (B, DIM_OUT)
    # bf16 matmul inputs + bf16 output store vs f32 reference -> loose tolerance.
    assert jnp.allclose(out, ref, atol=5e-2, rtol=5e-2), "mismatch vs reference"

    print("KERNEL_OK")
</pallas_src>

<mosaic_0001>
module attributes {stable_mosaic.version = 11 : i64} {
  func.func @cbc_kernel(%arg0: i32, %arg1: memref<256x32xf32, #tpu.memory_space<vmem>>, %arg2: memref<256x16xf32, #tpu.memory_space<vmem>>, %arg3: memref<48x384xbf16, #tpu.memory_space<vmem>>, %arg4: memref<128x128xbf16, #tpu.memory_space<vmem>>, %arg5: memref<128x128xbf16, #tpu.memory_space<vmem>>, %arg6: memref<1x384xf32, #tpu.memory_space<vmem>>, %arg7: memref<256x128xbf16, #tpu.memory_space<vmem>>) attributes {dimension_semantics = [#tpu.dimension_semantics<parallel>], iteration_bounds = array<i64: 1>, scalar_prefetch = 0 : i64, scratch_operands = 0 : i64, tpu.core_type = #tpu.core_type<tc>, window_params = [{transform_indices = @transform_0, window_bounds = array<i64: 256, 32>}, {transform_indices = @transform_1, window_bounds = array<i64: 256, 16>}, {pipeline_mode = #tpu.pipeline_mode<synchronous>, transform_indices = @transform_2, window_bounds = array<i64: 48, 384>}, {pipeline_mode = #tpu.pipeline_mode<synchronous>, transform_indices = @transform_3, window_bounds = array<i64: 128, 128>}, {pipeline_mode = #tpu.pipeline_mode<synchronous>, transform_indices = @transform_4, window_bounds = array<i64: 128, 128>}, {pipeline_mode = #tpu.pipeline_mode<synchronous>, transform_indices = @transform_5, window_bounds = array<i64: 1, 384>}, {transform_indices = @transform_6, window_bounds = array<i64: 256, 128>}]} {
    %c0 = arith.constant 0 : index
    %c0_0 = arith.constant 0 : index
    %0 = vector.load %arg1[%c0, %c0_0] : memref<256x32xf32, #tpu.memory_space<vmem>>, vector<256x32xf32>
    %c0_1 = arith.constant 0 : index
    %c0_2 = arith.constant 0 : index
    %1 = vector.load %arg2[%c0_1, %c0_2] : memref<256x16xf32, #tpu.memory_space<vmem>>, vector<256x16xf32>
    %2 = tpu.concatenate %0, %1 in 1 : vector<256x32xf32>, vector<256x16xf32> -> vector<256x48xf32>
    %3 = arith.truncf %2 : vector<256x48xf32> to vector<256x48xbf16>
    %c0_3 = arith.constant 0 : index
    %c0_4 = arith.constant 0 : index
    %4 = vector.load %arg3[%c0_3, %c0_4] : memref<48x384xbf16, #tpu.memory_space<vmem>>, vector<48x384xbf16>
    %cst = arith.constant dense<0.000000e+00> : vector<256x384xf32>
    %5 = tpu.matmul %3, %4, %cst {dimension_numbers = #tpu.dot_dimension_numbers<[1], [0], [0], [1], [0, 0, 1, 1], [], []>} : vector<256x48xbf16>, vector<48x384xbf16>, vector<256x384xf32> -> vector<256x384xf32>
    %c0_5 = arith.constant 0 : index
    %c0_6 = arith.constant 0 : index
    %6 = vector.load %arg6[%c0_5, %c0_6] : memref<1x384xf32, #tpu.memory_space<vmem>>, vector<1x384xf32>
    %7 = vector.broadcast %6 : vector<1x384xf32> to vector<256x384xf32>
    %8 = arith.addf %5, %7 : vector<256x384xf32>
    %9 = vector.extract_strided_slice %8 {offsets = [0, 0], sizes = [256, 128], strides = [1, 1]} : vector<256x384xf32> to vector<256x128xf32>
    %cst_7 = arith.constant 0.000000e+00 : f32
    %10 = vector.broadcast %cst_7 : f32 to vector<256x128xf32>
    %11 = arith.maximumf %9, %10 : vector<256x128xf32>
    %12 = arith.truncf %11 : vector<256x128xf32> to vector<256x128xbf16>
    %c0_8 = arith.constant 0 : index
    %c0_9 = arith.constant 0 : index
    %13 = vector.load %arg4[%c0_8, %c0_9] : memref<128x128xbf16, #tpu.memory_space<vmem>>, vector<128x128xbf16>
    %cst_10 = arith.constant dense<0.000000e+00> : vector<256x128xf32>
    %14 = tpu.matmul %12, %13, %cst_10 {dimension_numbers = #tpu.dot_dimension_numbers<[1], [0], [0], [1], [0, 0, 1, 1], [], []>} : vector<256x128xbf16>, vector<128x128xbf16>, vector<256x128xf32> -> vector<256x128xf32>
    %15 = vector.extract_strided_slice %8 {offsets = [0, 128], sizes = [256, 128], strides = [1, 1]} : vector<256x384xf32> to vector<256x128xf32>
    %16 = arith.addf %14, %15 : vector<256x128xf32>
    %cst_11 = arith.constant 0.000000e+00 : f32
    %17 = vector.broadcast %cst_11 : f32 to vector<256x128xf32>
    %18 = arith.maximumf %16, %17 : vector<256x128xf32>
    %19 = arith.truncf %18 : vector<256x128xf32> to vector<256x128xbf16>
    %c0_12 = arith.constant 0 : index
    %c0_13 = arith.constant 0 : index
    %20 = vector.load %arg5[%c0_12, %c0_13] : memref<128x128xbf16, #tpu.memory_space<vmem>>, vector<128x128xbf16>
    %cst_14 = arith.constant dense<0.000000e+00> : vector<256x128xf32>
    %21 = tpu.matmul %19, %20, %cst_14 {dimension_numbers = #tpu.dot_dimension_numbers<[1], [0], [0], [1], [0, 0, 1, 1], [], []>} : vector<256x128xbf16>, vector<128x128xbf16>, vector<256x128xf32> -> vector<256x128xf32>
    %22 = vector.extract_strided_slice %8 {offsets = [0, 256], sizes = [256, 128], strides = [1, 1]} : vector<256x384xf32> to vector<256x128xf32>
    %23 = arith.addf %21, %22 : vector<256x128xf32>
    %24 = arith.truncf %23 : vector<256x128xf32> to vector<256x128xbf16>
    %c0_15 = arith.constant 0 : index
    %c0_16 = arith.constant 0 : index
    %25 = vector.load %arg7[%c0_15, %c0_16] : memref<256x128xbf16, #tpu.memory_space<vmem>>, vector<256x128xbf16>
    tpu.vector_store %arg7[%c0_15, %c0_16], %24 {strides = array<i32>} : memref<256x128xbf16, #tpu.memory_space<vmem>>, vector<256x128xbf16>,
    return
  }
  func.func @transform_0(%arg0: i32) -> (i32, i32) {
    %c0_i32 = arith.constant 0 : i32
    %c0_i32_0 = arith.constant 0 : i32
    return %arg0, %c0_i32 : i32, i32
  }
  func.func @transform_1(%arg0: i32) -> (i32, i32) {
    %c0_i32 = arith.constant 0 : i32
    %c0_i32_0 = arith.constant 0 : i32
    return %arg0, %c0_i32 : i32, i32
  }
  func.func @transform_2(%arg0: i32) -> (i32, i32) {
    %c0_i32 = arith.constant 0 : i32
    %c0_i32_0 = arith.constant 0 : i32
    %c0_i32_1 = arith.constant 0 : i32
    return %c0_i32, %c0_i32_0 : i32, i32
  }
  func.func @transform_3(%arg0: i32) -> (i32, i32) {
    %c0_i32 = arith.constant 0 : i32
    %c0_i32_0 = arith.constant 0 : i32
    %c0_i32_1 = arith.constant 0 : i32
    return %c0_i32, %c0_i32_0 : i32, i32
  }
  func.func @transform_4(%arg0: i32) -> (i32, i32) {
    %c0_i32 = arith.constant 0 : i32
    %c0_i32_0 = arith.constant 0 : i32
    %c0_i32_1 = arith.constant 0 : i32
    return %c0_i32, %c0_i32_0 : i32, i32
  }
  func.func @transform_5(%arg0: i32) -> (i32, i32) {
    %c0_i32 = arith.constant 0 : i32
    %c0_i32_0 = arith.constant 0 : i32
    %c0_i32_1 = arith.constant 0 : i32
    return %c0_i32, %c0_i32_0 : i32, i32
  }
  func.func @transform_6(%arg0: i32) -> (i32, i32) {
    %c0_i32 = arith.constant 0 : i32
    %c0_i32_0 = arith.constant 0 : i32
    return %arg0, %c0_i32 : i32, i32
  }
}

</mosaic_0001>

<llo_original>
// kernel: tpu_custom_call.1
$region0: #{tpu_custom_call.1}
  #allocation0 [shape = 'u32[]', space=smem, size = 0x4, offset = 0x4, fixed_abs, tag = 'smem constant byte address 0x4 - core index']
  #allocation1 [shape = 'u32[72,128]{1,0:T(1,128)}', space=vmem, size = 0x9000, scoped, tag = 'internal scratch']
  %s0 = inlined_call_operand.vmem [shape: f32[256,32], index: 0, kind: input, shape index: {}]
  %s1 = inlined_call_operand.vmem [shape: f32[256,16], index: 1, kind: input, shape index: {}]
  %s2 = inlined_call_operand.vmem [shape: bf16[48,384], index: 2, kind: input, shape index: {}]
  %s3 = inlined_call_operand.vmem [shape: bf16[128,128], index: 3, kind: input, shape index: {}]
  %s4 = inlined_call_operand.vmem [shape: bf16[128,128], index: 4, kind: input, shape index: {}]
  %s5 = inlined_call_operand.vmem [shape: f32[1,384], index: 5, kind: input, shape index: {}]
  %s6 = inlined_call_operand.hbm [shape: bf16[256,128], index: 6, kind: output, shape index: {}]
  %s7 = sld [smem:[#allocation0]]
  $region34: #{tpu_custom_call.1} parent=0
    _
  %s9 = ssub.s32 1, %s7
  %s10 = scalar_select 0, %s9, %s7
  $region1: #{tpu_custom_call.1} parent=0
    #allocation2 [shape = 'u8[65536]{0}', space=vmem, size = 0x10000, scoped, tag = 'output window, operand 0, single buffered']
    #allocation3 [shape = 's32[1]{0}', space=sflag, size = 0x4, scoped, tag = 'scoped memory for tpu_custom_call.1']
    %11 = vsyncpa [#allocation3], 0
    // Predicated region
    $region2: #{tpu_custom_call.1} parent=1 // pred_check
      _
    $region3: #{tpu_custom_call.1} parent=1 // pred_check_branch
      %13 = sbr.rel (0) target = $region5
    $region4: #{tpu_custom_call.1} parent=1 // pred_region
      _
    $region5: #{tpu_custom_call.1} parent=1 // pred_fallthru
      _
    // Predicated region
    $region6: #{tpu_custom_call.1} parent=1 // pred_check
      _
    $region7: #{tpu_custom_call.1} parent=1 // pred_check_branch
      %15 = sbr.rel (0) target = $region9
    $region8: #{tpu_custom_call.1} parent=1 // pred_region
      _
    $region9: #{tpu_custom_call.1} parent=1 // pred_fallthru
      _
    // Predicated region
    $region10: #{tpu_custom_call.1} parent=1 // pred_check
      _
    $region11: #{tpu_custom_call.1} parent=1 // pred_check_branch
      %17 = sbr.rel (0) target = $region13
    $region12: #{tpu_custom_call.1} parent=1 // pred_region
      _
    $region13: #{tpu_custom_call.1} parent=1 // pred_fallthru
      _
    // Predicated region
    $region14: #{tpu_custom_call.1} parent=1 // pred_check
      _
    $region15: #{tpu_custom_call.1} parent=1 // pred_check_branch
      %19 = sbr.rel (0) target = $region17
    $region16: #{tpu_custom_call.1} parent=1 // pred_region
      _
    $region17: #{tpu_custom_call.1} parent=1 // pred_fallthru
      _
    // Predicated region
    $region18: #{tpu_custom_call.1} parent=1 // pred_check
      _
    $region19: #{tpu_custom_call.1} parent=1 // pred_check_branch
      %21 = sbr.rel (0) target = $region21
    $region20: #{tpu_custom_call.1} parent=1 // pred_region
      _
    $region21: #{tpu_custom_call.1} parent=1 // pred_fallthru
      _
    // Predicated region
    $region22: #{tpu_custom_call.1} parent=1 // pred_check
      _
    $region23: #{tpu_custom_call.1} parent=1 // pred_check_branch
      %23 = sbr.rel (0) target = $region25
    $region24: #{tpu_custom_call.1} parent=1 // pred_region
      _
    $region25: #{tpu_custom_call.1} parent=1 // pred_fallthru
      _
    %v25 = vld [vmem:[%s0] sm:$0xff]
    %v26 = vld [vmem:[%s0 + $0x8] sm:$0xff]
    %v27 = vld [vmem:[%s0 + $0x10] sm:$0xff]
    %v28 = vld [vmem:[%s0 + $0x18] sm:$0xff]
    %v29 = vld [vmem:[%s0 + $0x20] sm:$0xff]
    %v30 = vld [vmem:[%s0 + $0x28] sm:$0xff]
    %v31 = vld [vmem:[%s0 + $0x30] sm:$0xff]
    %v32 = vld [vmem:[%s0 + $0x38] sm:$0xff]
    %v33 = vld [vmem:[%s0 + $0x40] sm:$0xff]
    %v34 = vld [vmem:[%s0 + $0x48] sm:$0xff]
    %v35 = vld [vmem:[%s0 + $0x50] sm:$0xff]
    %v36 = vld [vmem:[%s0 + $0x58] sm:$0xff]
    %v37 = vld [vmem:[%s0 + $0x60] sm:$0xff]
    %v38 = vld [vmem:[%s0 + $0x68] sm:$0xff]
    %v39 = vld [vmem:[%s0 + $0x70] sm:$0xff]
    %v40 = vld [vmem:[%s0 + $0x78] sm:$0xff]
    %v41 = vld [vmem:[%s0 + $0x80] sm:$0xff]
    %v42 = vld [vmem:[%s0 + $0x88] sm:$0xff]
    %v43 = vld [vmem:[%s0 + $0x90] sm:$0xff]
    %v44 = vld [vmem:[%s0 + $0x98] sm:$0xff]
    %v45 = vld [vmem:[%s0 + $0xa0] sm:$0xff]
    %v46 = vld [vmem:[%s0 + $0xa8] sm:$0xff]
    %v47 = vld [vmem:[%s0 + $0xb0] sm:$0xff]
    %v48 = vld [vmem:[%s0 + $0xb8] sm:$0xff]
    %v49 = vld [vmem:[%s0 + $0xc0] sm:$0xff]
    %v50 = vld [vmem:[%s0 + $0xc8] sm:$0xff]
    %v51 = vld [vmem:[%s0 + $0xd0] sm:$0xff]
    %v52 = vld [vmem:[%s0 + $0xd8] sm:$0xff]
    %v53 = vld [vmem:[%s0 + $0xe0] sm:$0xff]
    %v54 = vld [vmem:[%s0 + $0xe8] sm:$0xff]
    %v55 = vld [vmem:[%s0 + $0xf0] sm:$0xff]
    %v56 = vld [vmem:[%s0 + $0xf8] sm:$0xff]
    %v57 = vld [vmem:[%s1] sm:$0xff]
    %v58 = vld [vmem:[%s1 + $0x8] sm:$0xff]
    %v59 = vld [vmem:[%s1 + $0x10] sm:$0xff]
    %v60 = vld [vmem:[%s1 + $0x18] sm:$0xff]
    %v61 = vld [vmem:[%s1 + $0x20] sm:$0xff]
    %v62 = vld [vmem:[%s1 + $0x28] sm:$0xff]
    %v63 = vld [vmem:[%s1 + $0x30] sm:$0xff]
    %v64 = vld [vmem:[%s1 + $0x38] sm:$0xff]
    %v65 = vld [vmem:[%s1 + $0x40] sm:$0xff]
    %v66 = vld [vmem:[%s1 + $0x48] sm:$0xff]
    %v67 = vld [vmem:[%s1 + $0x50] sm:$0xff]
    %v68 = vld [vmem:[%s1 + $0x58] sm:$0xff]
    %v69 = vld [vmem:[%s1 + $0x60] sm:$0xff]
    %v70 = vld [vmem:[%s1 + $0x68] sm:$0xff]
    %v71 = vld [vmem:[%s1 + $0x70] sm:$0xff]
    %v72 = vld [vmem:[%s1 + $0x78] sm:$0xff]
    %v73 = vld [vmem:[%s1 + $0x80] sm:$0xff]
    %v74 = vld [vmem:[%s1 + $0x88] sm:$0xff]
    %v75 = vld [vmem:[%s1 + $0x90] sm:$0xff]
    %v76 = vld [vmem:[%s1 + $0x98] sm:$0xff]
    %v77 = vld [vmem:[%s1 + $0xa0] sm:$0xff]
    %v78 = vld [vmem:[%s1 + $0xa8] sm:$0xff]
    %v79 = vld [vmem:[%s1 + $0xb0] sm:$0xff]
    %v80 = vld [vmem:[%s1 + $0xb8] sm:$0xff]
    %v81 = vld [vmem:[%s1 + $0xc0] sm:$0xff]
    %v82 = vld [vmem:[%s1 + $0xc8] sm:$0xff]
    %v83 = vld [vmem:[%s1 + $0xd0] sm:$0xff]
    %v84 = vld [vmem:[%s1 + $0xd8] sm:$0xff]
    %v85 = vld [vmem:[%s1 + $0xe0] sm:$0xff]
    %v86 = vld [vmem:[%s1 + $0xe8] sm:$0xff]
    %v87 = vld [vmem:[%s1 + $0xf0] sm:$0xff]
    %v88 = vld [vmem:[%s1 + $0xf8] sm:$0xff]
    %121 = vrot.lane.b32.xlu0 %v57, 32
    %v122 = vpop.permute.xlu0 %121
    %123 = vrot.lane.b32.xlu0 %v58, 32
    %v124 = vpop.permute.xlu0 %123
    %125 = vrot.lane.b32.xlu0 %v59, 32
    %v126 = vpop.permute.xlu0 %125
    %127 = vrot.lane.b32.xlu0 %v60, 32
    %v128 = vpop.permute.xlu0 %127
    %129 = vrot.lane.b32.xlu0 %v61, 32
    %v130 = vpop.permute.xlu0 %129
    %131 = vrot.lane.b32.xlu0 %v62, 32
    %v132 = vpop.permute.xlu0 %131
    %133 = vrot.lane.b32.xlu0 %v63, 32
    %v134 = vpop.permute.xlu0 %133
    %135 = vrot.lane.b32.xlu0 %v64, 32
    %v136 = vpop.permute.xlu0 %135
    %137 = vrot.lane.b32.xlu0 %v65, 32
    %v138 = vpop.permute.xlu0 %137
    %139 = vrot.lane.b32.xlu0 %v66, 32
    %v140 = vpop.permute.xlu0 %139
    %141 = vrot.lane.b32.xlu0 %v67, 32
    %v142 = vpop.permute.xlu0 %141
    %143 = vrot.lane.b32.xlu0 %v68, 32
    %v144 = vpop.permute.xlu0 %143
    %145 = vrot.lane.b32.xlu0 %v69, 32
    %v146 = vpop.permute.xlu0 %145
    %147 = vrot.lane.b32.xlu0 %v70, 32
    %v148 = vpop.permute.xlu0 %147
    %149 = vrot.lane.b32.xlu0 %v71, 32
    %v150 = vpop.permute.xlu0 %149
    %151 = vrot.lane.b32.xlu0 %v72, 32
    %v152 = vpop.permute.xlu0 %151
    %153 = vrot.lane.b32.xlu0 %v73, 32
    %v154 = vpop.permute.xlu0 %153
    %155 = vrot.lane.b32.xlu0 %v74, 32
    %v156 = vpop.permute.xlu0 %155
    %157 = vrot.lane.b32.xlu0 %v75, 32
    %v158 = vpop.permute.xlu0 %157
    %159 = vrot.lane.b32.xlu0 %v76, 32
    %v160 = vpop.permute.xlu0 %159
    %161 = vrot.lane.b32.xlu0 %v77, 32
    %v162 = vpop.permute.xlu0 %161
    %163 = vrot.lane.b32.xlu0 %v78, 32
    %v164 = vpop.permute.xlu0 %163
    %165 = vrot.lane.b32.xlu0 %v79, 32
    %v166 = vpop.permute.xlu0 %165
    %167 = vrot.lane.b32.xlu0 %v80, 32
    %v168 = vpop.permute.xlu0 %167
    %169 = vrot.lane.b32.xlu0 %v81, 32
    %v170 = vpop.permute.xlu0 %169
    %171 = vrot.lane.b32.xlu0 %v82, 32
    %v172 = vpop.permute.xlu0 %171
    %173 = vrot.lane.b32.xlu0 %v83, 32
    %v174 = vpop.permute.xlu0 %173
    %175 = vrot.lane.b32.xlu0 %v84, 32
    %v176 = vpop.permute.xlu0 %175
    %177 = vrot.lane.b32.xlu0 %v85, 32
    %v178 = vpop.permute.xlu0 %177
    %179 = vrot.lane.b32.xlu0 %v86, 32
    %v180 = vpop.permute.xlu0 %179
    %181 = vrot.lane.b32.xlu0 %v87, 32
    %v182 = vpop.permute.xlu0 %181
    %183 = vrot.lane.b32.xlu0 %v88, 32
    %v184 = vpop.permute.xlu0 %183
    %vm217 = vcmask 261120
    %v218 = vsel %vm217, %v25, %v122
    %v219 = vsel %vm217, %v26, %v124
    %v220 = vsel %vm217, %v27, %v126
    %v221 = vsel %vm217, %v28, %v128
    %v222 = vsel %vm217, %v29, %v130
    %v223 = vsel %vm217, %v30, %v132
    %v224 = vsel %vm217, %v31, %v134
    %v225 = vsel %vm217, %v32, %v136
    %v226 = vsel %vm217, %v33, %v138
    %v227 = vsel %vm217, %v34, %v140
    %v228 = vsel %vm217, %v35, %v142
    %v229 = vsel %vm217, %v36, %v144
    %v230 = vsel %vm217, %v37, %v146
    %v231 = vsel %vm217, %v38, %v148
    %v232 = vsel %vm217, %v39, %v150
    %v233 = vsel %vm217, %v40, %v152
    %v234 = vsel %vm217, %v41, %v154
    %v235 = vsel %vm217, %v42, %v156
    %v236 = vsel %vm217, %v43, %v158
    %v237 = vsel %vm217, %v44, %v160
    %v238 = vsel %vm217, %v45, %v162
    %v239 = vsel %vm217, %v46, %v164
    %v240 = vsel %vm217, %v47, %v166
    %v241 = vsel %vm217, %v48, %v168
    %v242 = vsel %vm217, %v49, %v170
    %v243 = vsel %vm217, %v50, %v172
    %v244 = vsel %vm217, %v51, %v174
    %v245 = vsel %vm217, %v52, %v176
    %v246 = vsel %vm217, %v53, %v178
    %v247 = vsel %vm217, %v54, %v180
    %v248 = vsel %vm217, %v55, %v182
    %v249 = vsel %vm217, %v56, %v184
    %v250 = vpack.c.bf16 %v219, %v218
    %v251 = vpack.c.bf16 %v221, %v220
    %v252 = vpack.c.bf16 %v223, %v222
    %v253 = vpack.c.bf16 %v225, %v224
    %v254 = vpack.c.bf16 %v227, %v226
    %v255 = vpack.c.bf16 %v229, %v228
    %v256 = vpack.c.bf16 %v231, %v230
    %v257 = vpack.c.bf16 %v233, %v232
    %v258 = vpack.c.bf16 %v235, %v234
    %v259 = vpack.c.bf16 %v237, %v236
    %v260 = vpack.c.bf16 %v239, %v238
    %v261 = vpack.c.bf16 %v241, %v240
    %v262 = vpack.c.bf16 %v243, %v242
    %v263 = vpack.c.bf16 %v245, %v244
    %v264 = vpack.c.bf16 %v247, %v246
    %v265 = vpack.c.bf16 %v249, %v248
    %v266 = vld [vmem:[%s2] sm:$0xff]
    %v267 = vld [vmem:[%s2 + $0x8] sm:$0xf]
    %v268 = vld [vmem:[%s2 + $0xc] sm:$0xff]
    %v269 = vld [vmem:[%s2 + $0x14] sm:$0xf]
    %v270 = vld [vmem:[%s2 + $0x18] sm:$0xff]
    %v271 = vld [vmem:[%s2 + $0x20] sm:$0xf]
    %v272 = vld [vmem:[%s2 + $0x24] sm:$0xff]
    %v273 = vld [vmem:[%s2 + $0x2c] sm:$0xf]
    %v274 = vld [vmem:[%s2 + $0x30] sm:$0xff]
    %v275 = vld [vmem:[%s2 + $0x38] sm:$0xf]
    %v276 = vld [vmem:[%s2 + $0x3c] sm:$0xff]
    %v277 = vld [vmem:[%s2 + $0x44] sm:$0xf]
    %v278 = vld [vmem:[%s5] sm:$0x7]
    %v280 = vperm.slane %v278, 0
    %v281 = vperm.slane %v278, 1
    %v282 = vperm.slane %v278, 2
    %v298 = vunpack.c.l.b16 %v266
    %v299 = vunpack.c.h.b16 %v266
    %v300 = vunpack.c.l.b16 %v267
    %v301 = vunpack.c.l.b16 %v268
    %v302 = vunpack.c.h.b16 %v268
    %v303 = vunpack.c.l.b16 %v269
    %v304 = vunpack.c.l.b16 %v270
    %v305 = vunpack.c.h.b16 %v270
    %v306 = vunpack.c.l.b16 %v271
    %v307 = vunpack.c.l.b16 %v272
    %v308 = vunpack.c.h.b16 %v272
    %v309 = vunpack.c.l.b16 %v273
    %v310 = vunpack.c.l.b16 %v274
    %v311 = vunpack.c.h.b16 %v274
    %v312 = vunpack.c.l.b16 %v275
    %v313 = vunpack.c.l.b16 %v276
    %v314 = vunpack.c.h.b16 %v276
    %v315 = vunpack.c.l.b16 %v277
    %v316 = vpack.c.b16 %v301, %v298
    %v317 = vpack.c.b16 %v302, %v299
    %v318 = vpack.c.b16 %v303, %v300
    %v319 = vpack.c.b16 %v307, %v304
    %v320 = vpack.c.b16 %v308, %v305
    %v321 = vpack.c.b16 %v309, %v306
    %v322 = vpack.c.b16 %v313, %v310
    %v323 = vpack.c.b16 %v314, %v311
    %v324 = vpack.c.b16 %v315, %v312
    %vm334 = vcmask 392192
    %v336 = vsel %vm334, %v250, 0
    %v339 = vsel %vm334, %v251, 0
    %v342 = vsel %vm334, %v252, 0
    %v345 = vsel %vm334, %v253, 0
    %v348 = vsel %vm334, %v254, 0
    %v351 = vsel %vm334, %v255, 0
    %v354 = vsel %vm334, %v256, 0
    %v357 = vsel %vm334, %v257, 0
    %v360 = vsel %vm334, %v258, 0
    %v363 = vsel %vm334, %v259, 0
    %v366 = vsel %vm334, %v260, 0
    %v369 = vsel %vm334, %v261, 0
    %v372 = vsel %vm334, %v262, 0
    %v375 = vsel %vm334, %v263, 0
    %v378 = vsel %vm334, %v264, 0
    %v381 = vsel %vm334, %v265, 0
    %383 = vmatpush.bf16.msra.mxu0 0
    %384 = vmatpush.bf16.msra.mxu0 0
    %385 = vmatpush.bf16.msra.mxu0 0
    %386 = vmatpush.bf16.msra.mxu0 0
    %387 = vmatpush.bf16.msra.mxu0 0
    %388 = vmatpush.bf16.msra.mxu0 %v322
    %389 = vmatpush.bf16.msra.mxu0 %v319
    %390 = vmatpush.bf16.msra.mxu0 %v316
    %391 = vmatmul.bf16.gmra.mxu0 %v336
    %v392 = vpop.f32.mrf.mxu0
    %v393 = vadd.f32 %v280, %v392
    %v394 = vpop.f32.mrf.mxu0
    %v395 = vadd.f32 %v280, %v394
    %396 = vmatmul.bf16.gmra.mxu0 %v339
    %v397 = vpop.f32.mrf.mxu0
    %v398 = vadd.f32 %v280, %v397
    %v399 = vpop.f32.mrf.mxu0
    %v400 = vadd.f32 %v280, %v399
    %401 = vmatmul.bf16.gmra.mxu0 %v342
    %v402 = vpop.f32.mrf.mxu0
    %v403 = vadd.f32 %v280, %v402
    %v404 = vpop.f32.mrf.mxu0
    %v405 = vadd.f32 %v280, %v404
    %406 = vmatmul.bf16.gmra.mxu0 %v345
    %v407 = vpop.f32.mrf.mxu0
    %v408 = vadd.f32 %v280, %v407
    %v409 = vpop.f32.mrf.mxu0
    %v410 = vadd.f32 %v280, %v409
    %411 = vmatmul.bf16.gmra.mxu0 %v348
    %v412 = vpop.f32.mrf.mxu0
    %v413 = vadd.f32 %v280, %v412
    %v414 = vpop.f32.mrf.mxu0
    %v415 = vadd.f32 %v280, %v414
    %416 = vmatmul.bf16.gmra.mxu0 %v351
    %v417 = vpop.f32.mrf.mxu0
    %v418 = vadd.f32 %v280, %v417
    %v419 = vpop.f32.mrf.mxu0
    %v420 = vadd.f32 %v280, %v419
    %421 = vmatmul.bf16.gmra.mxu0 %v354
    %v422 = vpop.f32.mrf.mxu0
    %v423 = vadd.f32 %v280, %v422
    %v424 = vpop.f32.mrf.mxu0
    %v425 = vadd.f32 %v280, %v424
    %426 = vmatmul.bf16.gmra.mxu0 %v357
    %v427 = vpop.f32.mrf.mxu0
    %v428 = vadd.f32 %v280, %v427
    %v429 = vpop.f32.mrf.mxu0
    %v430 = vadd.f32 %v280, %v429
    %431 = vmatmul.bf16.gmra.mxu0 %v360
    %v432 = vpop.f32.mrf.mxu0
    %v433 = vadd.f32 %v280, %v432
    %v434 = vpop.f32.mrf.mxu0
    %v435 = vadd.f32 %v280, %v434
    %436 = vmatmul.bf16.gmra.mxu0 %v363
    %v437 = vpop.f32.mrf.mxu0
    %v438 = vadd.f32 %v280, %v437
    %v439 = vpop.f32.mrf.mxu0
    %v440 = vadd.f32 %v280, %v439
    %441 = vmatmul.bf16.gmra.mxu0 %v366
    %v442 = vpop.f32.mrf.mxu0
    %v443 = vadd.f32 %v280, %v442
    %v444 = vpop.f32.mrf.mxu0
    %v445 = vadd.f32 %v280, %v444
    %446 = vmatmul.bf16.gmra.mxu0 %v369
    %v447 = vpop.f32.mrf.mxu0
    %v448 = vadd.f32 %v280, %v447
    %v449 = vpop.f32.mrf.mxu0
    %v450 = vadd.f32 %v280, %v449
    %451 = vmatmul.bf16.gmra.mxu0 %v372
    %v452 = vpop.f32.mrf.mxu0
    %v453 = vadd.f32 %v280, %v452
    %v454 = vpop.f32.mrf.mxu0
    %v455 = vadd.f32 %v280, %v454
    %456 = vmatmul.bf16.gmra.mxu0 %v375
    %v457 = vpop.f32.mrf.mxu0
    %v458 = vadd.f32 %v280, %v457
    %v459 = vpop.f32.mrf.mxu0
    %v460 = vadd.f32 %v280, %v459
    %461 = vmatmul.bf16.gmra.mxu0 %v378
    %v462 = vpop.f32.mrf.mxu0
    %v463 = vadd.f32 %v280, %v462
    %v464 = vpop.f32.mrf.mxu0
    %v465 = vadd.f32 %v280, %v464
    %466 = vmatmul.bf16.gmra.mxu0 %v381
    %v467 = vpop.f32.mrf.mxu0
    %v468 = vadd.f32 %v280, %v467
    %v469 = vpop.f32.mrf.mxu0
    %v470 = vadd.f32 %v280, %v469
    %471 = vdwg.mxu0
    %472 = vmatpush.bf16.msra.mxu0 0
    %473 = vmatpush.bf16.msra.mxu0 0
    %474 = vmatpush.bf16.msra.mxu0 0
    %475 = vmatpush.bf16.msra.mxu0 0
    %476 = vmatpush.bf16.msra.mxu0 0
    %477 = vmatpush.bf16.msra.mxu0 %v323
    %478 = vmatpush.bf16.msra.mxu0 %v320
    %479 = vmatpush.bf16.msra.mxu0 %v317
    %480 = vmatmul.bf16.gmra.mxu0 %v336
    %v481 = vpop.f32.mrf.mxu0
    %v482 = vadd.f32 %v281, %v481
    %v483 = vpop.f32.mrf.mxu0
    %v484 = vadd.f32 %v281, %v483
    %485 = vmatmul.bf16.gmra.mxu0 %v339
    %v486 = vpop.f32.mrf.mxu0
    %v487 = vadd.f32 %v281, %v486
    %v488 = vpop.f32.mrf.mxu0
    %v489 = vadd.f32 %v281, %v488
    %490 = vmatmul.bf16.gmra.mxu0 %v342
    %v491 = vpop.f32.mrf.mxu0
    %v492 = vadd.f32 %v281, %v491
    %v493 = vpop.f32.mrf.mxu0
    %v494 = vadd.f32 %v281, %v493
    %495 = vmatmul.bf16.gmra.mxu0 %v345
    %v496 = vpop.f32.mrf.mxu0
    %v497 = vadd.f32 %v281, %v496
    %v498 = vpop.f32.mrf.mxu0
    %v499 = vadd.f32 %v281, %v498
    %500 = vmatmul.bf16.gmra.mxu0 %v348
    %v501 = vpop.f32.mrf.mxu0
    %v502 = vadd.f32 %v281, %v501
    %v503 = vpop.f32.mrf.mxu0
    %v504 = vadd.f32 %v281, %v503
    %505 = vmatmul.bf16.gmra.mxu0 %v351
    %v506 = vpop.f32.mrf.mxu0
    %v507 = vadd.f32 %v281, %v506
    %v508 = vpop.f32.mrf.mxu0
    %v509 = vadd.f32 %v281, %v508
    %510 = vmatmul.bf16.gmra.mxu0 %v354
    %v511 = vpop.f32.mrf.mxu0
    %v512 = vadd.f32 %v281, %v511
    %v513 = vpop.f32.mrf.mxu0
    %v514 = vadd.f32 %v281, %v513
    %515 = vmatmul.bf16.gmra.mxu0 %v357
    %v516 = vpop.f32.mrf.mxu0
    %v517 = vadd.f32 %v281, %v516
    %v518 = vpop.f32.mrf.mxu0
    %v519 = vadd.f32 %v281, %v518
    %520 = vmatmul.bf16.gmra.mxu0 %v360
    %v521 = vpop.f32.mrf.mxu0
    %v522 = vadd.f32 %v281, %v521
    %v523 = vpop.f32.mrf.mxu0
    %v524 = vadd.f32 %v281, %v523
    %525 = vmatmul.bf16.gmra.mxu0 %v363
    %v526 = vpop.f32.mrf.mxu0
    %v527 = vadd.f32 %v281, %v526
    %v528 = vpop.f32.mrf.mxu0
    %v529 = vadd.f32 %v281, %v528
    %530 = vmatmul.bf16.gmra.mxu0 %v366
    %v531 = vpop.f32.mrf.mxu0
    %v532 = vadd.f32 %v281, %v531
    %v533 = vpop.f32.mrf.mxu0
    %v534 = vadd.f32 %v281, %v533
    %535 = vmatmul.bf16.gmra.mxu0 %v369
    %v536 = vpop.f32.mrf.mxu0
    %v537 = vadd.f32 %v281, %v536
    %v538 = vpop.f32.mrf.mxu0
    %v539 = vadd.f32 %v281, %v538
    %540 = vmatmul.bf16.gmra.mxu0 %v372
    %v541 = vpop.f32.mrf.mxu0
    %v542 = vadd.f32 %v281, %v541
    %v543 = vpop.f32.mrf.mxu0
    %v544 = vadd.f32 %v281, %v543
    %545 = vmatmul.bf16.gmra.mxu0 %v375
    %v546 = vpop.f32.mrf.mxu0
    %v547 = vadd.f32 %v281, %v546
    %v548 = vpop.f32.mrf.mxu0
    %v549 = vadd.f32 %v281, %v548
    %550 = vmatmul.bf16.gmra.mxu0 %v378
    %v551 = vpop.f32.mrf.mxu0
    %v552 = vadd.f32 %v281, %v551
    %v553 = vpop.f32.mrf.mxu0
    %v554 = vadd.f32 %v281, %v553
    %555 = vmatmul.bf16.gmra.mxu0 %v381
    %v556 = vpop.f32.mrf.mxu0
    %v557 = vadd.f32 %v281, %v556
    %v558 = vpop.f32.mrf.mxu0
    %v559 = vadd.f32 %v281, %v558
    %560 = vdwg.mxu0
    %561 = vmatpush.bf16.msra.mxu0 0
    %562 = vmatpush.bf16.msra.mxu0 0
    %563 = vmatpush.bf16.msra.mxu0 0
    %564 = vmatpush.bf16.msra.mxu0 0
    %565 = vmatpush.bf16.msra.mxu0 0
    %566 = vmatpush.bf16.msra.mxu0 %v324
    %567 = vmatpush.bf16.msra.mxu0 %v321
    %568 = vmatpush.bf16.msra.mxu0 %v318
    %569 = vmatmul.bf16.gmra.mxu0 %v336
    %v570 = vpop.f32.mrf.mxu0
    %v571 = vadd.f32 %v282, %v570
    %v572 = vpop.f32.mrf.mxu0
    %v573 = vadd.f32 %v282, %v572
    %574 = vmatmul.bf16.gmra.mxu0 %v339
    %v575 = vpop.f32.mrf.mxu0
    %v576 = vadd.f32 %v282, %v575
    %v577 = vpop.f32.mrf.mxu0
    %v578 = vadd.f32 %v282, %v577
    %579 = vmatmul.bf16.gmra.mxu0 %v342
    %v580 = vpop.f32.mrf.mxu0
    %v581 = vadd.f32 %v282, %v580
    %v582 = vpop.f32.mrf.mxu0
    %v583 = vadd.f32 %v282, %v582
    %584 = vmatmul.bf16.gmra.mxu0 %v345
    %v585 = vpop.f32.mrf.mxu0
    %v586 = vadd.f32 %v282, %v585
    %v587 = vpop.f32.mrf.mxu0
    %v588 = vadd.f32 %v282, %v587
    %589 = vmatmul.bf16.gmra.mxu0 %v348
    %v590 = vpop.f32.mrf.mxu0
    %v591 = vadd.f32 %v282, %v590
    %v592 = vpop.f32.mrf.mxu0
    %v593 = vadd.f32 %v282, %v592
    %594 = vmatmul.bf16.gmra.mxu0 %v351
    %v595 = vpop.f32.mrf.mxu0
    %v596 = vadd.f32 %v282, %v595
    %v597 = vpop.f32.mrf.mxu0
    %v598 = vadd.f32 %v282, %v597
    %599 = vmatmul.bf16.gmra.mxu0 %v354
    %v600 = vpop.f32.mrf.mxu0
    %v601 = vadd.f32 %v282, %v600
    %v602 = vpop.f32.mrf.mxu0
    %v603 = vadd.f32 %v282, %v602
    %604 = vmatmul.bf16.gmra.mxu0 %v357
    %v605 = vpop.f32.mrf.mxu0
    %v606 = vadd.f32 %v282, %v605
    %v607 = vpop.f32.mrf.mxu0
    %v608 = vadd.f32 %v282, %v607
    %609 = vmatmul.bf16.gmra.mxu0 %v360
    %v610 = vpop.f32.mrf.mxu0
    %v611 = vadd.f32 %v282, %v610
    %v612 = vpop.f32.mrf.mxu0
    %v613 = vadd.f32 %v282, %v612
    %614 = vmatmul.bf16.gmra.mxu0 %v363
    %v615 = vpop.f32.mrf.mxu0
    %v616 = vadd.f32 %v282, %v615
    %v617 = vpop.f32.mrf.mxu0
    %v618 = vadd.f32 %v282, %v617
    %619 = vmatmul.bf16.gmra.mxu0 %v366
    %v620 = vpop.f32.mrf.mxu0
    %v621 = vadd.f32 %v282, %v620
    %v622 = vpop.f32.mrf.mxu0
    %v623 = vadd.f32 %v282, %v622
    %624 = vmatmul.bf16.gmra.mxu0 %v369
    %v625 = vpop.f32.mrf.mxu0
    %v626 = vadd.f32 %v282, %v625
    %v627 = vpop.f32.mrf.mxu0
    %v628 = vadd.f32 %v282, %v627
    %629 = vmatmul.bf16.gmra.mxu0 %v372
    %v630 = vpop.f32.mrf.mxu0
    %v631 = vadd.f32 %v282, %v630
    %v632 = vpop.f32.mrf.mxu0
    %v633 = vadd.f32 %v282, %v632
    %634 = vmatmul.bf16.gmra.mxu0 %v375
    %v635 = vpop.f32.mrf.mxu0
    %v636 = vadd.f32 %v282, %v635
    %v637 = vpop.f32.mrf.mxu0
    %v638 = vadd.f32 %v282, %v637
    %639 = vmatmul.bf16.gmra.mxu0 %v378
    %v640 = vpop.f32.mrf.mxu0
    %v641 = vadd.f32 %v282, %v640
    %v642 = vpop.f32.mrf.mxu0
    %v643 = vadd.f32 %v282, %v642
    %644 = vmatmul.bf16.gmra.mxu0 %v381
    %v645 = vpop.f32.mrf.mxu0
    %v646 = vadd.f32 %v282, %v645
    %v647 = vpop.f32.mrf.mxu0
    %v648 = vadd.f32 %v282, %v647
    %649 = vdwg.mxu0
    %v650 = vmax.f32 %v393, 0.0
    %v651 = vmax.f32 %v395, 0.0
    %v652 = vmax.f32 %v398, 0.0
    %v653 = vmax.f32 %v400, 0.0
    %v654 = vmax.f32 %v403, 0.0
    %v655 = vmax.f32 %v405, 0.0
    %v656 = vmax.f32 %v408, 0.0
    %v657 = vmax.f32 %v410, 0.0
    %v658 = vmax.f32 %v413, 0.0
    %v659 = vmax.f32 %v415, 0.0
    %v660 = vmax.f32 %v418, 0.0
    %v661 = vmax.f32 %v420, 0.0
    %v662 = vmax.f32 %v423, 0.0
    %v663 = vmax.f32 %v425, 0.0
    %v664 = vmax.f32 %v428, 0.0
    %v665 = vmax.f32 %v430, 0.0
    %v666 = vmax.f32 %v433, 0.0
    %v667 = vmax.f32 %v435, 0.0
    %v668 = vmax.f32 %v438, 0.0
    %v669 = vmax.f32 %v440, 0.0
    %v670 = vmax.f32 %v443, 0.0
    %v671 = vmax.f32 %v445, 0.0
    %v672 = vmax.f32 %v448, 0.0
    %v673 = vmax.f32 %v450, 0.0
    %v674 = vmax.f32 %v453, 0.0
    %v675 = vmax.f32 %v455, 0.0
    %v676 = vmax.f32 %v458, 0.0
    %v677 = vmax.f32 %v460, 0.0
    %v678 = vmax.f32 %v463, 0.0
    %v679 = vmax.f32 %v465, 0.0
    %v680 = vmax.f32 %v468, 0.0
    %v681 = vmax.f32 %v470, 0.0
    %v682 = vpack.c.bf16 %v651, %v650
    %v683 = vpack.c.bf16 %v653, %v652
    %v684 = vpack.c.bf16 %v655, %v654
    %v685 = vpack.c.bf16 %v657, %v656
    %v686 = vpack.c.bf16 %v659, %v658
    %v687 = vpack.c.bf16 %v661, %v660
    %v688 = vpack.c.bf16 %v663, %v662
    %v689 = vpack.c.bf16 %v665, %v664
    %v690 = vpack.c.bf16 %v667, %v666
    %v691 = vpack.c.bf16 %v669, %v668
    %v692 = vpack.c.bf16 %v671, %v670
    %v693 = vpack.c.bf16 %v673, %v672
    %v694 = vpack.c.bf16 %v675, %v674
    %v695 = vpack.c.bf16 %v677, %v676
    %v696 = vpack.c.bf16 %v679, %v678
    %v697 = vpack.c.bf16 %v681, %v680
    %v698 = vld [vmem:[%s3] sm:$0xf]
    %v699 = vld [vmem:[%s3 + $0x4] sm:$0xf]
    %v700 = vld [vmem:[%s3 + $0x8] sm:$0xf]
    %v701 = vld [vmem:[%s3 + $0xc] sm:$0xf]
    %v702 = vld [vmem:[%s3 + $0x10] sm:$0xf]
    %v703 = vld [vmem:[%s3 + $0x14] sm:$0xf]
    %v704 = vld [vmem:[%s3 + $0x18] sm:$0xf]
    %v705 = vld [vmem:[%s3 + $0x1c] sm:$0xf]
    %v706 = vld [vmem:[%s3 + $0x20] sm:$0xf]
    %v707 = vld [vmem:[%s3 + $0x24] sm:$0xf]
    %v708 = vld [vmem:[%s3 + $0x28] sm:$0xf]
    %v709 = vld [vmem:[%s3 + $0x2c] sm:$0xf]
    %v710 = vld [vmem:[%s3 + $0x30] sm:$0xf]
    %v711 = vld [vmem:[%s3 + $0x34] sm:$0xf]
    %v712 = vld [vmem:[%s3 + $0x38] sm:$0xf]
    %v713 = vld [vmem:[%s3 + $0x3c] sm:$0xf]
    %v730 = vunpack.c.l.b16 %v698
    %v731 = vunpack.c.l.b16 %v699
    %v732 = vunpack.c.l.b16 %v700
    %v733 = vunpack.c.l.b16 %v701
    %v734 = vunpack.c.l.b16 %v702
    %v735 = vunpack.c.l.b16 %v703
    %v736 = vunpack.c.l.b16 %v704
    %v737 = vunpack.c.l.b16 %v705
    %v738 = vunpack.c.l.b16 %v706
    %v739 = vunpack.c.l.b16 %v707
    %v740 = vunpack.c.l.b16 %v708
    %v741 = vunpack.c.l.b16 %v709
    %v742 = vunpack.c.l.b16 %v710
    %v743 = vunpack.c.l.b16 %v711
    %v744 = vunpack.c.l.b16 %v712
    %v745 = vunpack.c.l.b16 %v713
    %v746 = vpack.c.b16 %v731, %v730
    %v747 = vpack.c.b16 %v733, %v732
    %v748 = vpack.c.b16 %v735, %v734
    %v749 = vpack.c.b16 %v737, %v736
    %v750 = vpack.c.b16 %v739, %v738
    %v751 = vpack.c.b16 %v741, %v740
    %v752 = vpack.c.b16 %v743, %v742
    %v753 = vpack.c.b16 %v745, %v744
    %762 = vmatpush.bf16.msra.mxu0 %v753
    %763 = vmatpush.bf16.msra.mxu0 %v752
    %764 = vmatpush.bf16.msra.mxu0 %v751
    %765 = vmatpush.bf16.msra.mxu0 %v750
    %766 = vmatpush.bf16.msra.mxu0 %v749
    %767 = vmatpush.bf16.msra.mxu0 %v748
    %768 = vmatpush.bf16.msra.mxu0 %v747
    %769 = vmatpush.bf16.msra.mxu0 %v746
    %770 = vmatmul.bf16.gmra.mxu0 %v682
    %v771 = vpop.f32.mrf.mxu0
    %v772 = vadd.f32 %v482, %v771
    %v773 = vpop.f32.mrf.mxu0
    %v774 = vadd.f32 %v484, %v773
    %775 = vmatmul.bf16.gmra.mxu0 %v683
    %v776 = vpop.f32.mrf.mxu0
    %v777 = vadd.f32 %v487, %v776
    %v778 = vpop.f32.mrf.mxu0
    %v779 = vadd.f32 %v489, %v778
    %780 = vmatmul.bf16.gmra.mxu0 %v684
    %v781 = vpop.f32.mrf.mxu0
    %v782 = vadd.f32 %v492, %v781
    %v783 = vpop.f32.mrf.mxu0
    %v784 = vadd.f32 %v494, %v783
    %785 = vmatmul.bf16.gmra.mxu0 %v685
    %v786 = vpop.f32.mrf.mxu0
    %v787 = vadd.f32 %v497, %v786
    %v788 = vpop.f32.mrf.mxu0
    %v789 = vadd.f32 %v499, %v788
    %790 = vmatmul.bf16.gmra.mxu0 %v686
    %v791 = vpop.f32.mrf.mxu0
    %v792 = vadd.f32 %v502, %v791
    %v793 = vpop.f32.mrf.mxu0
    %v794 = vadd.f32 %v504, %v793
    %795 = vmatmul.bf16.gmra.mxu0 %v687
    %v796 = vpop.f32.mrf.mxu0
    %v797 = vadd.f32 %v507, %v796
    %v798 = vpop.f32.mrf.mxu0
    %v799 = vadd.f32 %v509, %v798
    %800 = vmatmul.bf16.gmra.mxu0 %v688
    %v801 = vpop.f32.mrf.mxu0
    %v802 = vadd.f32 %v512, %v801
    %v803 = vpop.f32.mrf.mxu0
    %v804 = vadd.f32 %v514, %v803
    %805 = vmatmul.bf16.gmra.mxu0 %v689
    %v806 = vpop.f32.mrf.mxu0
    %v807 = vadd.f32 %v517, %v806
    %v808 = vpop.f32.mrf.mxu0
    %v809 = vadd.f32 %v519, %v808
    %810 = vmatmul.bf16.gmra.mxu0 %v690
    %v811 = vpop.f32.mrf.mxu0
    %v812 = vadd.f32 %v522, %v811
    %v813 = vpop.f32.mrf.mxu0
    %v814 = vadd.f32 %v524, %v813
    %815 = vmatmul.bf16.gmra.mxu0 %v691
    %v816 = vpop.f32.mrf.mxu0
    %v817 = vadd.f32 %v527, %v816
    %v818 = vpop.f32.mrf.mxu0
    %v819 = vadd.f32 %v529, %v818
    %820 = vmatmul.bf16.gmra.mxu0 %v692
    %v821 = vpop.f32.mrf.mxu0
    %v822 = vadd.f32 %v532, %v821
    %v823 = vpop.f32.mrf.mxu0
    %v824 = vadd.f32 %v534, %v823
    %825 = vmatmul.bf16.gmra.mxu0 %v693
    %v826 = vpop.f32.mrf.mxu0
    %v827 = vadd.f32 %v537, %v826
    %v828 = vpop.f32.mrf.mxu0
    %v829 = vadd.f32 %v539, %v828
    %830 = vmatmul.bf16.gmra.mxu0 %v694
    %v831 = vpop.f32.mrf.mxu0
    %v832 = vadd.f32 %v542, %v831
    %v833 = vpop.f32.mrf.mxu0
    %v834 = vadd.f32 %v544, %v833
    %835 = vmatmul.bf16.gmra.mxu0 %v695
    %v836 = vpop.f32.mrf.mxu0
    %v837 = vadd.f32 %v547, %v836
    %v838 = vpop.f32.mrf.mxu0
    %v839 = vadd.f32 %v549, %v838
    %840 = vmatmul.bf16.gmra.mxu0 %v696
    %v841 = vpop.f32.mrf.mxu0
    %v842 = vadd.f32 %v552, %v841
    %v843 = vpop.f32.mrf.mxu0
    %v844 = vadd.f32 %v554, %v843
    %845 = vmatmul.bf16.gmra.mxu0 %v697
    %v846 = vpop.f32.mrf.mxu0
    %v847 = vadd.f32 %v557, %v846
    %v848 = vpop.f32.mrf.mxu0
    %v849 = vadd.f32 %v559, %v848
    %850 = vdwg.mxu0
    %v851 = vmax.f32 %v772, 0.0
    %v852 = vmax.f32 %v774, 0.0
    %v853 = vmax.f32 %v777, 0.0
    %v854 = vmax.f32 %v779, 0.0
    %v855 = vmax.f32 %v782, 0.0
    %v856 = vmax.f32 %v784, 0.0
    %v857 = vmax.f32 %v787, 0.0
    %v858 = vmax.f32 %v789, 0.0
    %v859 = vmax.f32 %v792, 0.0
    %v860 = vmax.f32 %v794, 0.0
    %v861 = vmax.f32 %v797, 0.0
    %v862 = vmax.f32 %v799, 0.0
    %v863 = vmax.f32 %v802, 0.0
    %v864 = vmax.f32 %v804, 0.0
    %v865 = vmax.f32 %v807, 0.0
    %v866 = vmax.f32 %v809, 0.0
    %v867 = vmax.f32 %v812, 0.0
    %v868 = vmax.f32 %v814, 0.0
    %v869 = vmax.f32 %v817, 0.0
    %v870 = vmax.f32 %v819, 0.0
    %v871 = vmax.f32 %v822, 0.0
    %v872 = vmax.f32 %v824, 0.0
    %v873 = vmax.f32 %v827, 0.0
    %v874 = vmax.f32 %v829, 0.0
    %v875 = vmax.f32 %v832, 0.0
    %v876 = vmax.f32 %v834, 0.0
    %v877 = vmax.f32 %v837, 0.0
    %v878 = vmax.f32 %v839, 0.0
    %v879 = vmax.f32 %v842, 0.0
    %v880 = vmax.f32 %v844, 0.0
    %v881 = vmax.f32 %v847, 0.0
    %v882 = vmax.f32 %v849, 0.0
    %v883 = vpack.c.bf16 %v852, %v851
    %v884 = vpack.c.bf16 %v854, %v853
    %v885 = vpack.c.bf16 %v856, %v855
    %v886 = vpack.c.bf16 %v858, %v857
    %v887 = vpack.c.bf16 %v860, %v859
    %v888 = vpack.c.bf16 %v862, %v861
    %v889 = vpack.c.bf16 %v864, %v863
    %v890 = vpack.c.bf16 %v866, %v865
    %v891 = vpack.c.bf16 %v868, %v867
    %v892 = vpack.c.bf16 %v870, %v869
    %v893 = vpack.c.bf16 %v872, %v871
    %v894 = vpack.c.bf16 %v874, %v873
    %v895 = vpack.c.bf16 %v876, %v875
    %v896 = vpack.c.bf16 %v878, %v877
    %v897 = vpack.c.bf16 %v880, %v879
    %v898 = vpack.c.bf16 %v882, %v881
    %v899 = vld [vmem:[%s4] sm:$0xf]
    %v900 = vld [vmem:[%s4 + $0x4] sm:$0xf]
    %v901 = vld [vmem:[%s4 + $0x8] sm:$0xf]
    %v902 = vld [vmem:[%s4 + $0xc] sm:$0xf]
    %v903 = vld [vmem:[%s4 + $0x10] sm:$0xf]
    %v904 = vld [vmem:[%s4 + $0x14] sm:$0xf]
    %v905 = vld [vmem:[%s4 + $0x18] sm:$0xf]
    %v906 = vld [vmem:[%s4 + $0x1c] sm:$0xf]
    %v907 = vld [vmem:[%s4 + $0x20] sm:$0xf]
    %v908 = vld [vmem:[%s4 + $0x24] sm:$0xf]
    %v909 = vld [vmem:[%s4 + $0x28] sm:$0xf]
    %v910 = vld [vmem:[%s4 + $0x2c] sm:$0xf]
    %v911 = vld [vmem:[%s4 + $0x30] sm:$0xf]
    %v912 = vld [vmem:[%s4 + $0x34] sm:$0xf]
    %v913 = vld [vmem:[%s4 + $0x38] sm:$0xf]
    %v914 = vld [vmem:[%s4 + $0x3c] sm:$0xf]
    %v931 = vunpack.c.l.b16 %v899
    %v932 = vunpack.c.l.b16 %v900
    %v933 = vunpack.c.l.b16 %v901
    %v934 = vunpack.c.l.b16 %v902
    %v935 = vunpack.c.l.b16 %v903
    %v936 = vunpack.c.l.b16 %v904
    %v937 = vunpack.c.l.b16 %v905
    %v938 = vunpack.c.l.b16 %v906
    %v939 = vunpack.c.l.b16 %v907
    %v940 = vunpack.c.l.b16 %v908
    %v941 = vunpack.c.l.b16 %v909
    %v942 = vunpack.c.l.b16 %v910
    %v943 = vunpack.c.l.b16 %v911
    %v944 = vunpack.c.l.b16 %v912
    %v945 = vunpack.c.l.b16 %v913
    %v946 = vunpack.c.l.b16 %v914
    %v947 = vpack.c.b16 %v932, %v931
    %v948 = vpack.c.b16 %v934, %v933
    %v949 = vpack.c.b16 %v936, %v935
    %v950 = vpack.c.b16 %v938, %v937
    %v951 = vpack.c.b16 %v940, %v939
    %v952 = vpack.c.b16 %v942, %v941
    %v953 = vpack.c.b16 %v944, %v943
    %v954 = vpack.c.b16 %v946, %v945
    %963 = vmatpush.bf16.msra.mxu0 %v954
    %964 = vmatpush.bf16.msra.mxu0 %v953
    %965 = vmatpush.bf16.msra.mxu0 %v952
    %966 = vmatpush.bf16.msra.mxu0 %v951
    %967 = vmatpush.bf16.msra.mxu0 %v950
    %968 = vmatpush.bf16.msra.mxu0 %v949
    %969 = vmatpush.bf16.msra.mxu0 %v948
    %970 = vmatpush.bf16.msra.mxu0 %v947
    %971 = vmatmul.bf16.gmra.mxu0 %v883
    %v972 = vpop.f32.mrf.mxu0
    %v973 = vadd.f32 %v571, %v972
    %v974 = vpop.f32.mrf.mxu0
    %v975 = vadd.f32 %v573, %v974
    %976 = vmatmul.bf16.gmra.mxu0 %v884
    %v977 = vpop.f32.mrf.mxu0
    %v978 = vadd.f32 %v576, %v977
    %v979 = vpop.f32.mrf.mxu0
    %v980 = vadd.f32 %v578, %v979
    %981 = vmatmul.bf16.gmra.mxu0 %v885
    %v982 = vpop.f32.mrf.mxu0
    %v983 = vadd.f32 %v581, %v982
    %v984 = vpop.f32.mrf.mxu0
    %v985 = vadd.f32 %v583, %v984
    %986 = vmatmul.bf16.gmra.mxu0 %v886
    %v987 = vpop.f32.mrf.mxu0
    %v988 = vadd.f32 %v586, %v987
    %v989 = vpop.f32.mrf.mxu0
    %v990 = vadd.f32 %v588, %v989
    %991 = vmatmul.bf16.gmra.mxu0 %v887
    %v992 = vpop.f32.mrf.mxu0
    %v993 = vadd.f32 %v591, %v992
    %v994 = vpop.f32.mrf.mxu0
    %v995 = vadd.f32 %v593, %v994
    %996 = vmatmul.bf16.gmra.mxu0 %v888
    %v997 = vpop.f32.mrf.mxu0
    %v998 = vadd.f32 %v596, %v997
    %v999 = vpop.f32.mrf.mxu0
    %v1000 = vadd.f32 %v598, %v999
    %1001 = vmatmul.bf16.gmra.mxu0 %v889
    %v1002 = vpop.f32.mrf.mxu0
    %v1003 = vadd.f32 %v601, %v1002
    %v1004 = vpop.f32.mrf.mxu0
    %v1005 = vadd.f32 %v603, %v1004
    %1006 = vmatmul.bf16.gmra.mxu0 %v890
    %v1007 = vpop.f32.mrf.mxu0
    %v1008 = vadd.f32 %v606, %v1007
    %v1009 = vpop.f32.mrf.mxu0
    %v1010 = vadd.f32 %v608, %v1009
    %1011 = vmatmul.bf16.gmra.mxu0 %v891
    %v1012 = vpop.f32.mrf.mxu0
    %v1013 = vadd.f32 %v611, %v1012
    %v1014 = vpop.f32.mrf.mxu0
    %v1015 = vadd.f32 %v613, %v1014
    %1016 = vmatmul.bf16.gmra.mxu0 %v892
    %v1017 = vpop.f32.mrf.mxu0
    %v1018 = vadd.f32 %v616, %v1017
    %v1019 = vpop.f32.mrf.mxu0
    %v1020 = vadd.f32 %v618, %v1019
    %1021 = vmatmul.bf16.gmra.mxu0 %v893
    %v1022 = vpop.f32.mrf.mxu0
    %v1023 = vadd.f32 %v621, %v1022
    %v1024 = vpop.f32.mrf.mxu0
    %v1025 = vadd.f32 %v623, %v1024
    %1026 = vmatmul.bf16.gmra.mxu0 %v894
    %v1027 = vpop.f32.mrf.mxu0
    %v1028 = vadd.f32 %v626, %v1027
    %v1029 = vpop.f32.mrf.mxu0
    %v1030 = vadd.f32 %v628, %v1029
    %1031 = vmatmul.bf16.gmra.mxu0 %v895
    %v1032 = vpop.f32.mrf.mxu0
    %v1033 = vadd.f32 %v631, %v1032
    %v1034 = vpop.f32.mrf.mxu0
    %v1035 = vadd.f32 %v633, %v1034
    %1036 = vmatmul.bf16.gmra.mxu0 %v896
    %v1037 = vpop.f32.mrf.mxu0
    %v1038 = vadd.f32 %v636, %v1037
    %v1039 = vpop.f32.mrf.mxu0
    %v1040 = vadd.f32 %v638, %v1039
    %1041 = vmatmul.bf16.gmra.mxu0 %v897
    %v1042 = vpop.f32.mrf.mxu0
    %v1043 = vadd.f32 %v641, %v1042
    %v1044 = vpop.f32.mrf.mxu0
    %v1045 = vadd.f32 %v643, %v1044
    %1046 = vmatmul.bf16.gmra.mxu0 %v898
    %v1047 = vpop.f32.mrf.mxu0
    %v1048 = vadd.f32 %v646, %v1047
    %v1049 = vpop.f32.mrf.mxu0
    %v1050 = vadd.f32 %v648, %v1049
    %1051 = vdwg.mxu0
    %v1052 = vpack.c.bf16 %v973, %v973
    %v1053 = vpack.c.bf16 %v975, %v975
    %v1054 = vpack.c.bf16 %v978, %v978
    %v1055 = vpack.c.bf16 %v980, %v980
    %v1056 = vpack.c.bf16 %v983, %v983
    %v1057 = vpack.c.bf16 %v985, %v985
    %v1058 = vpack.c.bf16 %v988, %v988
    %v1059 = vpack.c.bf16 %v990, %v990
    %v1060 = vpack.c.bf16 %v993, %v993
    %v1061 = vpack.c.bf16 %v995, %v995
    %v1062 = vpack.c.bf16 %v998, %v998
    %v1063 = vpack.c.bf16 %v1000, %v1000
    %v1064 = vpack.c.bf16 %v1003, %v1003
    %v1065 = vpack.c.bf16 %v1005, %v1005
    %v1066 = vpack.c.bf16 %v1008, %v1008
    %v1067 = vpack.c.bf16 %v1010, %v1010
    %v1068 = vpack.c.bf16 %v1013, %v1013
    %v1069 = vpack.c.bf16 %v1015, %v1015
    %v1070 = vpack.c.bf16 %v1018, %v1018
    %v1071 = vpack.c.bf16 %v1020, %v1020
    %v1072 = vpack.c.bf16 %v1023, %v1023
    %v1073 = vpack.c.bf16 %v1025, %v1025
    %v1074 = vpack.c.bf16 %v1028, %v1028
    %v1075 = vpack.c.bf16 %v1030, %v1030
    %v1076 = vpack.c.bf16 %v1033, %v1033
    %v1077 = vpack.c.bf16 %v1035, %v1035
    %v1078 = vpack.c.bf16 %v1038, %v1038
    %v1079 = vpack.c.bf16 %v1040, %v1040
    %v1080 = vpack.c.bf16 %v1043, %v1043
    %v1081 = vpack.c.bf16 %v1045, %v1045
    %v1082 = vpack.c.bf16 %v1048, %v1048
    %v1083 = vpack.c.bf16 %v1050, %v1050
    %1084 = vst [vmem:[#allocation2] sm:$0xf] %v1052
    %1085 = vst [vmem:[#allocation2 + $0x4] sm:$0xf] %v1053
    %1086 = vst [vmem:[#allocation2 + $0x8] sm:$0xf] %v1054
    %1087 = vst [vmem:[#allocation2 + $0xc] sm:$0xf] %v1055
    %1088 = vst [vmem:[#allocation2 + $0x10] sm:$0xf] %v1056
    %1089 = vst [vmem:[#allocation2 + $0x14] sm:$0xf] %v1057
    %1090 = vst [vmem:[#allocation2 + $0x18] sm:$0xf] %v1058
    %1091 = vst [vmem:[#allocation2 + $0x1c] sm:$0xf] %v1059
    %1092 = vst [vmem:[#allocation2 + $0x20] sm:$0xf] %v1060
    %1093 = vst [vmem:[#allocation2 + $0x24] sm:$0xf] %v1061
    %1094 = vst [vmem:[#allocation2 + $0x28] sm:$0xf] %v1062
    %1095 = vst [vmem:[#allocation2 + $0x2c] sm:$0xf] %v1063
    %1096 = vst [vmem:[#allocation2 + $0x30] sm:$0xf] %v1064
    %1097 = vst [vmem:[#allocation2 + $0x34] sm:$0xf] %v1065
    %1098 = vst [vmem:[#allocation2 + $0x38] sm:$0xf] %v1066
    %1099 = vst [vmem:[#allocation2 + $0x3c] sm:$0xf] %v1067
    %1100 = vst [vmem:[#allocation2 + $0x40] sm:$0xf] %v1068
    %1101 = vst [vmem:[#allocation2 + $0x44] sm:$0xf] %v1069
    %1102 = vst [vmem:[#allocation2 + $0x48] sm:$0xf] %v1070
    %1103 = vst [vmem:[#allocation2 + $0x4c] sm:$0xf] %v1071
    %1104 = vst [vmem:[#allocation2 + $0x50] sm:$0xf] %v1072
    %1105 = vst [vmem:[#allocation2 + $0x54] sm:$0xf] %v1073
    %1106 = vst [vmem:[#allocation2 + $0x58] sm:$0xf] %v1074
    %1107 = vst [vmem:[#allocation2 + $0x5c] sm:$0xf] %v1075
    %1108 = vst [vmem:[#allocation2 + $0x60] sm:$0xf] %v1076
    %1109 = vst [vmem:[#allocation2 + $0x64] sm:$0xf] %v1077
    %1110 = vst [vmem:[#allocation2 + $0x68] sm:$0xf] %v1078
    %1111 = vst [vmem:[#allocation2 + $0x6c] sm:$0xf] %v1079
    %1112 = vst [vmem:[#allocation2 + $0x70] sm:$0xf] %v1080
    %1113 = vst [vmem:[#allocation2 + $0x74] sm:$0xf] %v1081
    %1114 = vst [vmem:[#allocation2 + $0x78] sm:$0xf] %v1082
    %1115 = vst [vmem:[#allocation2 + $0x7c] sm:$0xf] %v1083
    // Predicated region
    $region26: #{tpu_custom_call.1} parent=1 // pred_check
      _
    $region27: #{tpu_custom_call.1} parent=1 // pred_check_branch
      %1117 = sbr.rel (0) target = $region29
    $region28: #{tpu_custom_call.1} parent=1 // pred_region
      %1119 = vsyncadd [#allocation3], 0
      %s1120 = sshll.u32 [#allocation2], 4
      %s1121 = int_to_ptr.vmem [resolvable:$true] %s1120
      %s1122 = sshll.u32 %s6, 4
      %s1123 = int_to_ptr.hbm [resolvable:$true] %s1122
      %1128 = dma.vmem_to_hbm [thread:$0]  %s1121, 2048, %s1123, [#allocation3], 64, 64, 4
    $region29: #{tpu_custom_call.1} parent=1 // pred_fallthru
      _
    // Predicated region
    $region30: #{tpu_custom_call.1} parent=1 // pred_check
      _
    $region31: #{tpu_custom_call.1} parent=1 // pred_check_branch
      %1130 = sbr.rel (0) target = $region33
    $region32: #{tpu_custom_call.1} parent=1 // pred_region
      %1132 = dma.done [#allocation3], 2048
    $region33: #{tpu_custom_call.1} parent=1 // pred_fallthru
      _
    %1133 = vsyncpa [#allocation3], 1

</llo_original>
